<compile_context>
chip_gen: v7x
topology: tpu7x:2x2x1
jax: 0.10.0
libtpu: 0.0.40
codegen_flags: <defaults>
</compile_context>

<pallas_src>
import functools

import jax
import jax.numpy as jnp
from jax.experimental import pallas as pl
from jax.experimental.pallas import tpu as pltpu


def _round_up(v: int, m: int) -> int:
    return ((v + m - 1) // m) * m


def _proj_head_kernel(x_ref, w1_ref, b1_ref, w2_ref, b2_ref, o_ref, acc_ref, *,
                      apply_sigmoid: bool):
    """grid = (batch_tiles, k_tiles); the K (reduction) axis is last and 'arbitrary'."""
    k = pl.program_id(1)

    @pl.when(k == 0)
    def _():
        acc_ref[...] = jnp.zeros_like(acc_ref)

    # Linear 1 (BN folded into W1/b1 by prepare_params): bf16 MXU, f32 accumulation.
    acc_ref[...] += jnp.dot(x_ref[...], w1_ref[...],
                            preferred_element_type=jnp.float32)

    @pl.when(k == pl.num_programs(1) - 1)
    def _():
        # Bias + ReLU (VPU), then Linear 2 on the MXU in bf16.
        h = jnp.maximum(acc_ref[...] + b1_ref[...], 0.0).astype(jnp.bfloat16)
        y = jnp.dot(h, w2_ref[...], preferred_element_type=jnp.float32)
        y = y + b2_ref[...]
        # Dropout is identity in eval mode; sigmoid only when output_dims == 2.
        if apply_sigmoid:
            y = jax.nn.sigmoid(y)
        o_ref[...] = y.astype(o_ref.dtype)


def prepare_params(params, *, output_dims: int, eps: float = 1e-5):
    """One-time (model-load) fold of BatchNorm1d(eval) into Linear-1 plus layout prep:
    K padded to a lane-aligned multiple, output dim padded to 128 lanes, weights in bf16."""
    w1, b1 = params["w1"], params["b1"]
    w2, b2 = params["w2"], params["b2"]
    gamma, beta = params["gamma"], params["beta"]
    run_mean, run_var = params["run_mean"], params["run_var"]

    K, H = w1.shape

    inv_std = 1.0 / jnp.sqrt(run_var + eps)
    scale = gamma * inv_std                               # (H,)
    shift = beta - run_mean * scale                       # (H,)
    w1f = w1 * scale[None, :]                             # (K, H)
    b1f = (b1 * scale + shift).reshape(1, -1).astype(jnp.float32)

    # Pad contraction dim so it tiles in lane-aligned chunks (zeros contribute nothing).
    K_pad = _round_up(K, 128)
    if K_pad != K:
        w1f = jnp.pad(w1f, ((0, K_pad - K), (0, 0)))

    # Pad the (tiny) output dim to a full 128-lane slab -> lane-dense unmasked stores.
    n_pad = _round_up(max(output_dims, 128), 128)
    w2p = jnp.zeros((H, n_pad), jnp.float32).at[:, :output_dims].set(w2)
    b2p = jnp.zeros((1, n_pad), jnp.float32).at[:, :output_dims].set(b2.reshape(1, -1))

    return dict(
        w1=w1f.astype(jnp.bfloat16),   # (K_pad, H)  bf16, BN folded
        b1=b1f,                        # (1, H)      f32, BN folded
        w2=w2p.astype(jnp.bfloat16),   # (H, n_pad)  bf16, lane padded
        b2=b2p,                        # (1, n_pad)  f32, lane padded
        output_dims=output_dims, K=K, H=H, K_pad=K_pad, n_pad=n_pad,
    )


def projection_head_forward(x, prepared, *, tb: int = 512):
    """x: (B, input_dims). `prepared` comes from prepare_params()."""
    out_dims = prepared["output_dims"]
    K, H = prepared["K"], prepared["H"]
    K_pad, n_pad = prepared["K_pad"], prepared["n_pad"]
    w1, b1, w2, b2 = prepared["w1"], prepared["b1"], prepared["w2"], prepared["b2"]

    B = x.shape[0]
    assert x.shape[1] == K

    # ---- K (reduction) tiling: lane aligned; whole K in one step when it is small. ----
    if K_pad <= 1024:
        TK = K_pad
    else:
        TK = 128
        for cand in (1024, 512, 256):
            if K_pad % cand == 0:
                TK = cand
                break

    # ---- Batch tiling: multiple of 16 (bf16 sublane packing). ----
    TB = min(_round_up(tb, 16), _round_up(B, 16))
    if B >= 32:
        # Keep >= 2 batch tiles so the "parallel" axis can shard across v7x's 2 TCs.
        TB = min(TB, _round_up((B + 1) // 2, 16))

    # ---- Deliberate VMEM budget (constant-index weights single-buffered). ----
    try:
        vmem_phys = pltpu.get_tpu_info().vmem_capacity_bytes
    except Exception:
        vmem_phys = 64 << 20  # conservative (v7x per-TC)
    vmem_budget = int(vmem_phys * 0.75)

    def vmem_estimate(tb_):
        return (2 * tb_ * TK * 2          # x tiles (bf16, double buffered)
                + 2 * TK * H * 2          # W1 K-tiles (bf16, double buffered)
                + 8 * H * 4               # b1 (single buffered, sublane padded)
                + H * n_pad * 2           # W2 (bf16, single buffered)
                + 8 * n_pad * 4           # b2
                + 2 * tb_ * n_pad * 4     # out tiles (f32, double buffered)
                + tb_ * H * 4)            # f32 accumulator scratch

    while vmem_estimate(TB) > vmem_budget and TB > 16:
        TB = max(16, _round_up(TB // 2, 16))

    B_pad = _round_up(B, TB)
    grid = (B_pad // TB, K_pad // TK)

    # ---- Input layout: bf16, padded to (B_pad, K_pad). ----
    xb = x.astype(jnp.bfloat16)
    if (B_pad != B) or (K_pad != K):
        xb = jnp.pad(xb, ((0, B_pad - B), (0, K_pad - K)))

    vmem_limit = min(max(int(vmem_estimate(TB) * 1.5) + (4 << 20), 32 << 20),
                     vmem_budget)

    apply_sigmoid = (out_dims == 2)
    kernel = functools.partial(_proj_head_kernel, apply_sigmoid=apply_sigmoid)

    def _resident_spec(shape):
        # Constant-index operands: fetched once; request a single buffer (halves their
        # VMEM cost). Fall back silently if this JAX build lacks pipeline_mode.
        try:
            return pl.BlockSpec(shape, lambda i, k: (0, 0),
                                pipeline_mode=pl.Buffered(1))
        except Exception:
            return pl.BlockSpec(shape, lambda i, k: (0, 0))

    cost = pl.CostEstimate(
        flops=2 * B_pad * (K_pad * H + H * n_pad),
        transcendentals=(B_pad * n_pad if apply_sigmoid else 0),
        bytes_accessed=(2 * (B_pad * K_pad + K_pad * H + H * n_pad)
                        + 4 * (H + n_pad + B_pad * n_pad)),
    )

    out = pl.pallas_call(
        kernel,
        out_shape=jax.ShapeDtypeStruct((B_pad, n_pad), jnp.float32),
        grid_spec=pltpu.PrefetchScalarGridSpec(
            num_scalar_prefetch=0,
            grid=grid,
            in_specs=[
                pl.BlockSpec((TB, TK), lambda i, k: (i, k)),   # x tile (pipelined)
                pl.BlockSpec((TK, H), lambda i, k: (k, 0)),    # W1 K-tile (pipelined)
                _resident_spec((1, H)),                        # b1 (BN folded), resident
                _resident_spec((H, n_pad)),                    # W2 (lane padded), resident
                _resident_spec((1, n_pad)),                    # b2, resident
            ],
            out_specs=pl.BlockSpec((TB, n_pad), lambda i, k: (i, 0)),
            scratch_shapes=[pltpu.VMEM((TB, H), jnp.float32)],
        ),
        compiler_params=pltpu.CompilerParams(
            dimension_semantics=("parallel", "arbitrary"),
            vmem_limit_bytes=vmem_limit),
        cost_estimate=cost,
    )(xb, w1, b1, w2, b2)

    # Strip batch padding and the lane padding of the output dimension.
    return out[:B, :out_dims]


def build_params(key, input_dims, hidden_dims, output_dims):
    k1, k2, k3, k4, k5 = jax.random.split(key, 5)
    # Deterministic synthetic init (shapes match the torch module's __init__,
    # with linear weights stored pre-transposed as (in, out)).
    w1 = jax.random.normal(k1, (input_dims, hidden_dims), jnp.float32) * 0.1
    b1 = jax.random.normal(k2, (hidden_dims,), jnp.float32) * 0.01
    w2 = jax.random.normal(k3, (hidden_dims, output_dims), jnp.float32) * 0.1
    b2 = jax.random.normal(k4, (output_dims,), jnp.float32) * 0.01
    # BatchNorm1d params / running stats (eval mode).
    gamma = jnp.ones((hidden_dims,), jnp.float32)
    beta = jnp.zeros((hidden_dims,), jnp.float32)
    run_mean = jax.random.normal(k5, (hidden_dims,), jnp.float32) * 0.05
    run_var = jnp.ones((hidden_dims,), jnp.float32)
    return dict(w1=w1, b1=b1, gamma=gamma, beta=beta,
                run_mean=run_mean, run_var=run_var, w2=w2, b2=b2)


def reference_forward(x, params, *, output_dims):
    eps = 1e-5
    h = x @ params["w1"] + params["b1"]
    h = (h - params["run_mean"]) / jnp.sqrt(params["run_var"] + eps)
    h = h * params["gamma"] + params["beta"]
    h = jnp.maximum(h, 0.0)
    y = h @ params["w2"] + params["b2"]
    if output_dims == 2:
        y = jax.nn.sigmoid(y)
    return y


if __name__ == "__main__":
    B, input_dims, hidden_dims, output_dims = 8, 32, 128, 2

    key = jax.random.PRNGKey(0)
    kx, kp = jax.random.split(key)
    x = jax.random.normal(kx, (B, input_dims), jnp.float32)
    params = build_params(kp, input_dims, hidden_dims, output_dims)

    prepared = prepare_params(params, output_dims=output_dims)  # one-time weight prep
    out = projection_head_forward(x, prepared)
    out = jax.block_until_ready(out)

    ref = reference_forward(x, params, output_dims=output_dims)
    assert out.shape == (B, output_dims)
    # bf16 MXU path -> looser tolerance than the pure-f32 reference.
    assert jnp.allclose(out, ref, atol=2e-2, rtol=2e-2), "mismatch vs reference"

    print("KERNEL_OK")
</pallas_src>

<mosaic_0001>
module attributes {stable_mosaic.version = 11 : i64} {
  func.func @_proj_head_kernel(%arg0: i32, %arg1: i32, %arg2: memref<16x128xbf16, #tpu.memory_space<vmem>>, %arg3: memref<128x128xbf16, #tpu.memory_space<vmem>>, %arg4: memref<1x128xf32, #tpu.memory_space<vmem>>, %arg5: memref<128x128xbf16, #tpu.memory_space<vmem>>, %arg6: memref<1x128xf32, #tpu.memory_space<vmem>>, %arg7: memref<16x128xf32, #tpu.memory_space<vmem>>, %arg8: memref<16x128xf32, #tpu.memory_space<vmem>>) attributes {dimension_semantics = [#tpu.dimension_semantics<parallel>, #tpu.dimension_semantics<arbitrary>], iteration_bounds = array<i64: 1, 1>, scalar_prefetch = 0 : i64, scratch_operands = 1 : i64, tpu.core_type = #tpu.core_type<tc>, window_params = [{transform_indices = @transform_0, window_bounds = array<i64: 16, 128>}, {transform_indices = @transform_1, window_bounds = array<i64: 128, 128>}, {pipeline_mode = #tpu.pipeline_mode<synchronous>, transform_indices = @transform_2, window_bounds = array<i64: 1, 128>}, {pipeline_mode = #tpu.pipeline_mode<synchronous>, transform_indices = @transform_3, window_bounds = array<i64: 128, 128>}, {pipeline_mode = #tpu.pipeline_mode<synchronous>, transform_indices = @transform_4, window_bounds = array<i64: 1, 128>}, {transform_indices = @transform_5, window_bounds = array<i64: 16, 128>}]} {
    %c0_i32 = arith.constant 0 : i32
    %0 = arith.cmpi eq, %arg1, %c0_i32 : i32
    %1 = arith.extui %0 : i1 to i32
    %c0_i32_0 = arith.constant 0 : i32
    %2 = arith.cmpi ne, %1, %c0_i32_0 : i32
    scf.if %2 {
      %cst_10 = arith.constant 0.000000e+00 : f32
      %12 = vector.broadcast %cst_10 : f32 to vector<16x128xf32>
      %c0_11 = arith.constant 0 : index
      %c0_12 = arith.constant 0 : index
      %13 = vector.load %arg8[%c0_11, %c0_12] : memref<16x128xf32, #tpu.memory_space<vmem>>, vector<16x128xf32>
      tpu.vector_store %arg8[%c0_11, %c0_12], %12 {strides = array<i32>} : memref<16x128xf32, #tpu.memory_space<vmem>>, vector<16x128xf32>,
    } else {
    }
    %c0 = arith.constant 0 : index
    %c0_1 = arith.constant 0 : index
    %3 = vector.load %arg8[%c0, %c0_1] : memref<16x128xf32, #tpu.memory_space<vmem>>, vector<16x128xf32>
    %c0_2 = arith.constant 0 : index
    %c0_3 = arith.constant 0 : index
    %4 = vector.load %arg2[%c0_2, %c0_3] : memref<16x128xbf16, #tpu.memory_space<vmem>>, vector<16x128xbf16>
    %c0_4 = arith.constant 0 : index
    %c0_5 = arith.constant 0 : index
    %5 = vector.load %arg3[%c0_4, %c0_5] : memref<128x128xbf16, #tpu.memory_space<vmem>>, vector<128x128xbf16>
    %cst = arith.constant dense<0.000000e+00> : vector<16x128xf32>
    %6 = tpu.matmul %4, %5, %cst {dimension_numbers = #tpu.dot_dimension_numbers<[1], [0], [0], [1], [0, 0, 1, 1], [], []>} : vector<16x128xbf16>, vector<128x128xbf16>, vector<16x128xf32> -> vector<16x128xf32>
    %7 = arith.addf %3, %6 : vector<16x128xf32>
    %c0_6 = arith.constant 0 : index
    %c0_7 = arith.constant 0 : index
    %8 = vector.load %arg8[%c0_6, %c0_7] : memref<16x128xf32, #tpu.memory_space<vmem>>, vector<16x128xf32>
    tpu.vector_store %arg8[%c0_6, %c0_7], %7 {strides = array<i32>} : memref<16x128xf32, #tpu.memory_space<vmem>>, vector<16x128xf32>,
    %c0_i32_8 = arith.constant 0 : i32
    %9 = arith.cmpi eq, %arg1, %c0_i32_8 : i32
    %10 = arith.extui %9 : i1 to i32
    %c0_i32_9 = arith.constant 0 : i32
    %11 = arith.cmpi ne, %10, %c0_i32_9 : i32
    scf.if %11 {
      %c0_10 = arith.constant 0 : index
      %c0_11 = arith.constant 0 : index
      %12 = vector.load %arg8[%c0_10, %c0_11] : memref<16x128xf32, #tpu.memory_space<vmem>>, vector<16x128xf32>
      %c0_12 = arith.constant 0 : index
      %c0_13 = arith.constant 0 : index
      %13 = vector.load %arg4[%c0_12, %c0_13] : memref<1x128xf32, #tpu.memory_space<vmem>>, vector<1x128xf32>
      %14 = vector.broadcast %13 : vector<1x128xf32> to vector<16x128xf32>
      %15 = arith.addf %12, %14 : vector<16x128xf32>
      %cst_14 = arith.constant 0.000000e+00 : f32
      %16 = vector.broadcast %cst_14 : f32 to vector<16x128xf32>
      %17 = arith.maximumf %15, %16 : vector<16x128xf32>
      %18 = arith.truncf %17 : vector<16x128xf32> to vector<16x128xbf16>
      %c0_15 = arith.constant 0 : index
      %c0_16 = arith.constant 0 : index
      %19 = vector.load %arg5[%c0_15, %c0_16] : memref<128x128xbf16, #tpu.memory_space<vmem>>, vector<128x128xbf16>
      %cst_17 = arith.constant dense<0.000000e+00> : vector<16x128xf32>
      %20 = tpu.matmul %18, %19, %cst_17 {dimension_numbers = #tpu.dot_dimension_numbers<[1], [0], [0], [1], [0, 0, 1, 1], [], []>} : vector<16x128xbf16>, vector<128x128xbf16>, vector<16x128xf32> -> vector<16x128xf32>
      %c0_18 = arith.constant 0 : index
      %c0_19 = arith.constant 0 : index
      %21 = vector.load %arg6[%c0_18, %c0_19] : memref<1x128xf32, #tpu.memory_space<vmem>>, vector<1x128xf32>
      %22 = vector.broadcast %21 : vector<1x128xf32> to vector<16x128xf32>
      %23 = arith.addf %20, %22 : vector<16x128xf32>
      %24 = arith.negf %23 : vector<16x128xf32>
      %25 = math.exp %24 : vector<16x128xf32>
      %cst_20 = arith.constant 1.000000e+00 : f32
      %26 = vector.broadcast %cst_20 : f32 to vector<16x128xf32>
      %27 = arith.addf %26, %25 : vector<16x128xf32>
      %28 = arith.divf %26, %27 : vector<16x128xf32>
      %c0_21 = arith.constant 0 : index
      %c0_22 = arith.constant 0 : index
      %29 = vector.load %arg7[%c0_21, %c0_22] : memref<16x128xf32, #tpu.memory_space<vmem>>, vector<16x128xf32>
      tpu.vector_store %arg7[%c0_21, %c0_22], %28 {strides = array<i32>} : memref<16x128xf32, #tpu.memory_space<vmem>>, vector<16x128xf32>,
    } else {
    }
    return
  }
  func.func @transform_0(%arg0: i32, %arg1: i32) -> (i32, i32) {
    %c0_i32 = arith.constant 0 : i32
    return %arg0, %arg1 : i32, i32
  }
  func.func @transform_1(%arg0: i32, %arg1: i32) -> (i32, i32) {
    %c0_i32 = arith.constant 0 : i32
    %c0_i32_0 = arith.constant 0 : i32
    return %arg1, %c0_i32 : i32, i32
  }
  func.func @transform_2(%arg0: i32, %arg1: i32) -> (i32, i32) {
    %c0_i32 = arith.constant 0 : i32
    %c0_i32_0 = arith.constant 0 : i32
    %c0_i32_1 = arith.constant 0 : i32
    return %c0_i32, %c0_i32_0 : i32, i32
  }
  func.func @transform_3(%arg0: i32, %arg1: i32) -> (i32, i32) {
    %c0_i32 = arith.constant 0 : i32
    %c0_i32_0 = arith.constant 0 : i32
    %c0_i32_1 = arith.constant 0 : i32
    return %c0_i32, %c0_i32_0 : i32, i32
  }
  func.func @transform_4(%arg0: i32, %arg1: i32) -> (i32, i32) {
    %c0_i32 = arith.constant 0 : i32
    %c0_i32_0 = arith.constant 0 : i32
    %c0_i32_1 = arith.constant 0 : i32
    return %c0_i32, %c0_i32_0 : i32, i32
  }
  func.func @transform_5(%arg0: i32, %arg1: i32) -> (i32, i32) {
    %c0_i32 = arith.constant 0 : i32
    %c0_i32_0 = arith.constant 0 : i32
    return %arg0, %c0_i32 : i32, i32
  }
}

</mosaic_0001>

<llo_original>
// kernel: tpu_custom_call.1
$region0: #{tpu_custom_call.1}
  #allocation0 [shape = 'u32[]', space=smem, size = 0x4, offset = 0x4, fixed_abs, tag = 'smem constant byte address 0x4 - core index']
  #allocation1 [shape = 'u32[144,128]{1,0:T(1,128)}', space=vmem, size = 0x12000, scoped, tag = 'internal scratch']
  #allocation2 [shape = 'f32[16,128]{1,0:T(8,128)}', space=vmem, size = 0x2000, scoped, tag = 'scratch operand']
  %s0 = inlined_call_operand.hbm [shape: bf16[16,128], index: 0, kind: input, shape index: {}]
  %s1 = inlined_call_operand.hbm [shape: bf16[128,128], index: 1, kind: input, shape index: {}]
  %s2 = inlined_call_operand.vmem [shape: f32[1,128], index: 2, kind: input, shape index: {}]
  %s3 = inlined_call_operand.hbm [shape: bf16[128,128], index: 3, kind: input, shape index: {}]
  %s4 = inlined_call_operand.vmem [shape: f32[1,128], index: 4, kind: input, shape index: {}]
  %s5 = inlined_call_operand.hbm [shape: f32[16,128], index: 5, kind: output, shape index: {}]
  %s6 = sld [smem:[#allocation0]]
  $region50: #{tpu_custom_call.1} parent=0
    _
  %s8 = ssub.s32 1, %s6
  %s9 = scalar_select 0, %s8, %s6
  $region1: #{tpu_custom_call.1} parent=0
    #allocation3 [shape = 'u8[4096]{0}', space=vmem, size = 0x1000, scoped, tag = 'input window, operand 0, single buffered']
    #allocation4 [shape = 's32[1]{0}', space=sflag, size = 0x4, scoped, tag = 'scoped memory for tpu_custom_call.1']
    #allocation5 [shape = 's32[1]{0}', space=sflag, size = 0x4, scoped, tag = 'scoped memory for tpu_custom_call.1']
    #allocation6 [shape = 'u8[32768]{0}', space=vmem, size = 0x8000, scoped, tag = 'input window, operand 1, single buffered']
    #allocation7 [shape = 's32[1]{0}', space=sflag, size = 0x4, scoped, tag = 'scoped memory for tpu_custom_call.1']
    #allocation8 [shape = 'u8[32768]{0}', space=vmem, size = 0x8000, scoped, tag = 'input window, operand 3, single buffered']
    #allocation9 [shape = 'u8[8192]{0}', space=vmem, size = 0x2000, scoped, tag = 'output window, operand 0, single buffered']
    %10 = vsyncpa [#allocation4], 0
    %11 = vsyncpa [#allocation7], 0
    %12 = vsyncpa [#allocation5], 0
    // Predicated region
    $region2: #{tpu_custom_call.1} parent=1 // pred_check
      _
    $region3: #{tpu_custom_call.1} parent=1 // pred_check_branch
      %14 = sbr.rel (0) target = $region5
    $region4: #{tpu_custom_call.1} parent=1 // pred_region
      %s16 = ssub.s32 128, 128
      %17 = vsyncadd [#allocation4], %s16
      %s18 = sshll.u32 [#allocation3], 4
      %s19 = int_to_ptr.vmem [resolvable:$true] %s18
      %24 = dma.hbm_to_vmem [thread:$0]  %s0, 128, %s19, [#allocation4], 64, 64, 4
    $region5: #{tpu_custom_call.1} parent=1 // pred_fallthru
      _
    // Predicated region
    $region6: #{tpu_custom_call.1} parent=1 // pred_check
      _
    $region7: #{tpu_custom_call.1} parent=1 // pred_check_branch
      %26 = sbr.rel (0) target = $region9
    $region8: #{tpu_custom_call.1} parent=1 // pred_region
      %s28 = ssub.s32 1024, 1024
      %29 = vsyncadd [#allocation7], %s28
      %s30 = sshll.u32 [#allocation6], 4
      %s31 = int_to_ptr.vmem [resolvable:$true] %s30
      %36 = dma.hbm_to_vmem [thread:$0]  %s1, 1024, %s31, [#allocation7], 64, 64, 4
    $region9: #{tpu_custom_call.1} parent=1 // pred_fallthru
      _
    // Predicated region
    $region10: #{tpu_custom_call.1} parent=1 // pred_check
      _
    $region11: #{tpu_custom_call.1} parent=1 // pred_check_branch
      %38 = sbr.rel (0) target = $region13
    $region12: #{tpu_custom_call.1} parent=1 // pred_region
      _
    $region13: #{tpu_custom_call.1} parent=1 // pred_fallthru
      _
    // Predicated region
    $region14: #{tpu_custom_call.1} parent=1 // pred_check
      _
    $region15: #{tpu_custom_call.1} parent=1 // pred_check_branch
      %40 = sbr.rel (0) target = $region17
    $region16: #{tpu_custom_call.1} parent=1 // pred_region
      %s42 = ssub.s32 1024, 1024
      %43 = vsyncadd [#allocation7], %s42
      %s44 = sshll.u32 [#allocation8], 4
      %s45 = int_to_ptr.vmem [resolvable:$true] %s44
      %50 = dma.hbm_to_vmem [thread:$0]  %s3, 1024, %s45, [#allocation7], 64, 64, 4
    $region17: #{tpu_custom_call.1} parent=1 // pred_fallthru
      _
    // Predicated region
    $region18: #{tpu_custom_call.1} parent=1 // pred_check
      _
    $region19: #{tpu_custom_call.1} parent=1 // pred_check_branch
      %52 = sbr.rel (0) target = $region21
    $region20: #{tpu_custom_call.1} parent=1 // pred_region
      _
    $region21: #{tpu_custom_call.1} parent=1 // pred_fallthru
      _
    // Predicated region
    $region22: #{tpu_custom_call.1} parent=1 // pred_check
      _
    $region23: #{tpu_custom_call.1} parent=1 // pred_check_branch
      %54 = sbr.rel (0) target = $region25
    $region24: #{tpu_custom_call.1} parent=1 // pred_region
      %55 = dma.done [#allocation4], 128
    $region25: #{tpu_custom_call.1} parent=1 // pred_fallthru
      _
    // Predicated region
    $region26: #{tpu_custom_call.1} parent=1 // pred_check
      _
    $region27: #{tpu_custom_call.1} parent=1 // pred_check_branch
      %57 = sbr.rel (0) target = $region29
    $region28: #{tpu_custom_call.1} parent=1 // pred_region
      %58 = dma.done [#allocation7], 1024
    $region29: #{tpu_custom_call.1} parent=1 // pred_fallthru
      _
    // Predicated region
    $region30: #{tpu_custom_call.1} parent=1 // pred_check
      _
    $region31: #{tpu_custom_call.1} parent=1 // pred_check_branch
      %60 = sbr.rel (0) target = $region33
    $region32: #{tpu_custom_call.1} parent=1 // pred_region
      %61 = dma.done [#allocation7], 1024
    $region33: #{tpu_custom_call.1} parent=1 // pred_fallthru
      _
    %p63 = scmp.eq.s32.totalorder 0, 0
    // Predicated region
    $region34: #{tpu_custom_call.1} parent=1 // pred_check
      %p64 = pneg %p63
    $region35: #{tpu_custom_call.1} parent=1 // pred_check_branch
      %66 = sbr.rel (%p64) target = $region37
    $region36: #{tpu_custom_call.1} parent=1 // pred_region
      %67 = vst [vmem:[#allocation2] sm:$0xff] 0.0
      %68 = vst [vmem:[#allocation2 + $0x8] sm:$0xff] 0.0
    $region37: #{tpu_custom_call.1} parent=1 // pred_fallthru
      _
    %v69 = vld [vmem:[#allocation2] sm:$0xff]
    %v70 = vld [vmem:[#allocation2 + $0x8] sm:$0xff]
    %v71 = vld [vmem:[#allocation3] sm:$0xf]
    %v72 = vld [vmem:[#allocation3 + $0x4] sm:$0xf]
    %v73 = vld [vmem:[#allocation6] sm:$0xf]
    %v74 = vld [vmem:[#allocation6 + $0x4] sm:$0xf]
    %v75 = vld [vmem:[#allocation6 + $0x8] sm:$0xf]
    %v76 = vld [vmem:[#allocation6 + $0xc] sm:$0xf]
    %v77 = vld [vmem:[#allocation6 + $0x10] sm:$0xf]
    %v78 = vld [vmem:[#allocation6 + $0x14] sm:$0xf]
    %v79 = vld [vmem:[#allocation6 + $0x18] sm:$0xf]
    %v80 = vld [vmem:[#allocation6 + $0x1c] sm:$0xf]
    %v81 = vld [vmem:[#allocation6 + $0x20] sm:$0xf]
    %v82 = vld [vmem:[#allocation6 + $0x24] sm:$0xf]
    %v83 = vld [vmem:[#allocation6 + $0x28] sm:$0xf]
    %v84 = vld [vmem:[#allocation6 + $0x2c] sm:$0xf]
    %v85 = vld [vmem:[#allocation6 + $0x30] sm:$0xf]
    %v86 = vld [vmem:[#allocation6 + $0x34] sm:$0xf]
    %v87 = vld [vmem:[#allocation6 + $0x38] sm:$0xf]
    %v88 = vld [vmem:[#allocation6 + $0x3c] sm:$0xf]
    %v91 = vunpack.c.l.b16 %v71
    %v92 = vunpack.c.l.b16 %v72
    %v93 = vpack.c.b16 %v92, %v91
    %v111 = vunpack.c.l.b16 %v73
    %v112 = vunpack.c.l.b16 %v74
    %v113 = vunpack.c.l.b16 %v75
    %v114 = vunpack.c.l.b16 %v76
    %v115 = vunpack.c.l.b16 %v77
    %v116 = vunpack.c.l.b16 %v78
    %v117 = vunpack.c.l.b16 %v79
    %v118 = vunpack.c.l.b16 %v80
    %v119 = vunpack.c.l.b16 %v81
    %v120 = vunpack.c.l.b16 %v82
    %v121 = vunpack.c.l.b16 %v83
    %v122 = vunpack.c.l.b16 %v84
    %v123 = vunpack.c.l.b16 %v85
    %v124 = vunpack.c.l.b16 %v86
    %v125 = vunpack.c.l.b16 %v87
    %v126 = vunpack.c.l.b16 %v88
    %v127 = vpack.c.b16 %v112, %v111
    %v128 = vpack.c.b16 %v114, %v113
    %v129 = vpack.c.b16 %v116, %v115
    %v130 = vpack.c.b16 %v118, %v117
    %v131 = vpack.c.b16 %v120, %v119
    %v132 = vpack.c.b16 %v122, %v121
    %v133 = vpack.c.b16 %v124, %v123
    %v134 = vpack.c.b16 %v126, %v125
    %143 = vmatprep.subr.bf16.mxu0 0
    %144 = vmatpush1.bf16.msra.mxu0 %v127
    %145 = vmatprep.subr.bf16.mxu0 0
    %146 = vmatpush1.bf16.msra.mxu0 %v128
    %147 = vmatprep.subr.bf16.mxu0 0
    %148 = vmatpush1.bf16.msra.mxu0 %v129
    %149 = vmatprep.subr.bf16.mxu0 0
    %150 = vmatpush1.bf16.msra.mxu0 %v130
    %151 = vmatprep.subr.bf16.mxu0 0
    %152 = vmatpush1.bf16.msra.mxu0 %v131
    %153 = vmatprep.subr.bf16.mxu0 0
    %154 = vmatpush1.bf16.msra.mxu0 %v132
    %155 = vmatprep.subr.bf16.mxu0 0
    %156 = vmatpush1.bf16.msra.mxu0 %v133
    %157 = vmatprep.subr.bf16.mxu0 0
    %158 = vmatpush1.bf16.msra.mxu0 %v134
    %159 = vmatprep.subr.bf16.mxu0 0
    %160 = vmatpush1.bf16.msra.mxu0 0
    %161 = vmatprep.subr.bf16.mxu0 0
    %162 = vmatpush1.bf16.msra.mxu0 0
    %163 = vmatprep.subr.bf16.mxu0 0
    %164 = vmatpush1.bf16.msra.mxu0 0
    %165 = vmatprep.subr.bf16.mxu0 0
    %166 = vmatpush1.bf16.msra.mxu0 0
    %167 = vmatprep.subr.bf16.mxu0 0
    %168 = vmatpush1.bf16.msra.mxu0 0
    %169 = vmatprep.subr.bf16.mxu0 0
    %170 = vmatpush1.bf16.msra.mxu0 0
    %171 = vmatprep.subr.bf16.mxu0 0
    %172 = vmatpush1.bf16.msra.mxu0 0
    %173 = vmatprep.subr.bf16.mxu0 0
    %174 = vmatpush1.bf16.msra.mxu0 0
    %175 = vmatprep.mubr.bf16.mxu0 0
    %176 = vmatmul.mubr.bf16.gmra.mrb[0].mxu0 %v93
    %v177 = vpop.f32.mrb[0].mxu0
    %v178 = vadd.f32 0.0, %v177
    %v179 = vpop.f32.mrb[0].mxu0
    %v180 = vpop.f32.mrb[0].mxu0
    %v181 = vadd.f32 0.0, %v180
    %v182 = vpop.f32.mrb[0].mxu0
    %183 = vdwg.mxu0
    %v184 = vadd.f32 %v69, %v178
    %v185 = vadd.f32 %v70, %v181
    %186 = vst [vmem:[#allocation2] sm:$0xff] %v184
    %187 = vst [vmem:[#allocation2 + $0x8] sm:$0xff] %v185
    // Predicated region
    $region38: #{tpu_custom_call.1} parent=1 // pred_check
      %p188 = pneg %p63
    $region39: #{tpu_custom_call.1} parent=1 // pred_check_branch
      %190 = sbr.rel (%p188) target = $region41
    $region40: #{tpu_custom_call.1} parent=1 // pred_region
      %v191 = vld [vmem:[#allocation2] sm:$0xff]
      %v192 = vld [vmem:[#allocation2 + $0x8] sm:$0xff]
      %v193 = vld [vmem:[%s2] sm:$0x1]
      %v195 = vlaneseq
      %v196 = vshrl.u32 %v195, 7
      %v197 = vsub.s32 0, %v196
      %v198 = vrot.slane %v193, %v197
      %v200 = vadd.f32 %v191, %v198
      %v201 = vadd.f32 %v192, %v198
      %v202 = vmax.f32 %v200, 0.0
      %v203 = vmax.f32 %v201, 0.0
      %v204 = vpack.c.bf16 %v203, %v202
      %v205 = vld [vmem:[#allocation8] sm:$0xf]
      %v206 = vld [vmem:[#allocation8 + $0x4] sm:$0xf]
      %v207 = vld [vmem:[#allocation8 + $0x8] sm:$0xf]
      %v208 = vld [vmem:[#allocation8 + $0xc] sm:$0xf]
      %v209 = vld [vmem:[#allocation8 + $0x10] sm:$0xf]
      %v210 = vld [vmem:[#allocation8 + $0x14] sm:$0xf]
      %v211 = vld [vmem:[#allocation8 + $0x18] sm:$0xf]
      %v212 = vld [vmem:[#allocation8 + $0x1c] sm:$0xf]
      %v213 = vld [vmem:[#allocation8 + $0x20] sm:$0xf]
      %v214 = vld [vmem:[#allocation8 + $0x24] sm:$0xf]
      %v215 = vld [vmem:[#allocation8 + $0x28] sm:$0xf]
      %v216 = vld [vmem:[#allocation8 + $0x2c] sm:$0xf]
      %v217 = vld [vmem:[#allocation8 + $0x30] sm:$0xf]
      %v218 = vld [vmem:[#allocation8 + $0x34] sm:$0xf]
      %v219 = vld [vmem:[#allocation8 + $0x38] sm:$0xf]
      %v220 = vld [vmem:[#allocation8 + $0x3c] sm:$0xf]
      %v221 = vld [vmem:[%s4] sm:$0x1]
      %v223 = vlaneseq
      %v224 = vshrl.u32 %v223, 7
      %v225 = vsub.s32 0, %v224
      %v226 = vrot.slane %v221, %v225
      %v244 = vunpack.c.l.b16 %v205
      %v245 = vunpack.c.l.b16 %v206
      %v246 = vunpack.c.l.b16 %v207
      %v247 = vunpack.c.l.b16 %v208
      %v248 = vunpack.c.l.b16 %v209
      %v249 = vunpack.c.l.b16 %v210
      %v250 = vunpack.c.l.b16 %v211
      %v251 = vunpack.c.l.b16 %v212
      %v252 = vunpack.c.l.b16 %v213
      %v253 = vunpack.c.l.b16 %v214
      %v254 = vunpack.c.l.b16 %v215
      %v255 = vunpack.c.l.b16 %v216
      %v256 = vunpack.c.l.b16 %v217
      %v257 = vunpack.c.l.b16 %v218
      %v258 = vunpack.c.l.b16 %v219
      %v259 = vunpack.c.l.b16 %v220
      %v260 = vpack.c.b16 %v245, %v244
      %v261 = vpack.c.b16 %v247, %v246
      %v262 = vpack.c.b16 %v249, %v248
      %v263 = vpack.c.b16 %v251, %v250
      %v264 = vpack.c.b16 %v253, %v252
      %v265 = vpack.c.b16 %v255, %v254
      %v266 = vpack.c.b16 %v257, %v256
      %v267 = vpack.c.b16 %v259, %v258
      %276 = vmatprep.subr.bf16.mxu0 0
      %277 = vmatpush1.bf16.msra.mxu0 %v260
      %278 = vmatprep.subr.bf16.mxu0 0
      %279 = vmatpush1.bf16.msra.mxu0 %v261
      %280 = vmatprep.subr.bf16.mxu0 0
      %281 = vmatpush1.bf16.msra.mxu0 %v262
      %282 = vmatprep.subr.bf16.mxu0 0
      %283 = vmatpush1.bf16.msra.mxu0 %v263
      %284 = vmatprep.subr.bf16.mxu0 0
      %285 = vmatpush1.bf16.msra.mxu0 %v264
      %286 = vmatprep.subr.bf16.mxu0 0
      %287 = vmatpush1.bf16.msra.mxu0 %v265
      %288 = vmatprep.subr.bf16.mxu0 0
      %289 = vmatpush1.bf16.msra.mxu0 %v266
      %290 = vmatprep.subr.bf16.mxu0 0
      %291 = vmatpush1.bf16.msra.mxu0 %v267
      %292 = vmatprep.subr.bf16.mxu0 0
      %293 = vmatpush1.bf16.msra.mxu0 0
      %294 = vmatprep.subr.bf16.mxu0 0
      %295 = vmatpush1.bf16.msra.mxu0 0
      %296 = vmatprep.subr.bf16.mxu0 0
      %297 = vmatpush1.bf16.msra.mxu0 0
      %298 = vmatprep.subr.bf16.mxu0 0
      %299 = vmatpush1.bf16.msra.mxu0 0
      %300 = vmatprep.subr.bf16.mxu0 0
      %301 = vmatpush1.bf16.msra.mxu0 0
      %302 = vmatprep.subr.bf16.mxu0 0
      %303 = vmatpush1.bf16.msra.mxu0 0
      %304 = vmatprep.subr.bf16.mxu0 0
      %305 = vmatpush1.bf16.msra.mxu0 0
      %306 = vmatprep.subr.bf16.mxu0 0
      %307 = vmatpush1.bf16.msra.mxu0 0
      %308 = vmatprep.mubr.bf16.mxu0 0
      %309 = vmatmul.mubr.bf16.gmra.mrb[0].mxu0 %v204
      %v310 = vpop.f32.mrb[0].mxu0
      %v311 = vadd.f32 %v226, %v310
      %v312 = vpop.f32.mrb[0].mxu0
      %v313 = vpop.f32.mrb[0].mxu0
      %v314 = vadd.f32 %v226, %v313
      %v315 = vpop.f32.mrb[0].mxu0
      %316 = vdwg.mxu0
      %v317 = vxor.u32 %v311, 2147483648
      %v318 = vxor.u32 %v314, 2147483648
      %v319 = vmul.f32 %v317, 1.442695
      %v320 = vpow.pop %v319
      %v321 = vmul.f32 %v318, 1.442695
      %v322 = vpow.pop %v321
      %v323 = vadd.f32 %v320, 1.0
      %v324 = vadd.f32 %v322, 1.0
      %v325 = vrcp.pop %v323
      %v326 = vmul.f32 1.0, %v325
      %v327 = vrcp.pop %v324
      %v328 = vmul.f32 1.0, %v327
      %329 = vst [vmem:[#allocation9] sm:$0xff] %v326
      %330 = vst [vmem:[#allocation9 + $0x8] sm:$0xff] %v328
    $region41: #{tpu_custom_call.1} parent=1 // pred_fallthru
      _
    // Predicated region
    $region42: #{tpu_custom_call.1} parent=1 // pred_check
      _
    $region43: #{tpu_custom_call.1} parent=1 // pred_check_branch
      %332 = sbr.rel (0) target = $region45
    $region44: #{tpu_custom_call.1} parent=1 // pred_region
      %s334 = ssub.s32 256, 256
      %335 = vsyncadd [#allocation5], %s334
      %s336 = sshll.u32 [#allocation9], 4
      %s337 = int_to_ptr.vmem [resolvable:$true] %s336
      %342 = dma.vmem_to_hbm [thread:$0]  %s337, 256, %s5, [#allocation5], 128, 128, 8
    $region45: #{tpu_custom_call.1} parent=1 // pred_fallthru
      _
    // Predicated region
    $region46: #{tpu_custom_call.1} parent=1 // pred_check
      _
    $region47: #{tpu_custom_call.1} parent=1 // pred_check_branch
      %344 = sbr.rel (0) target = $region49
    $region48: #{tpu_custom_call.1} parent=1 // pred_region
      %345 = dma.done [#allocation5], 256
    $region49: #{tpu_custom_call.1} parent=1 // pred_fallthru
      _
    %346 = vsyncpa [#allocation4], 1
    %347 = vsyncpa [#allocation7], 1
    %348 = vsyncpa [#allocation5], 1

</llo_original>
